<compile_context>
chip_gen: v6e
topology: v6e:2x2x1
jax: 0.10.0
libtpu: 0.0.40
codegen_flags: <defaults>
</compile_context>

<pallas_src>
import jax
import jax.numpy as jnp
from jax.experimental import pallas as pl
from jax.experimental.pallas import tpu as pltpu


def _drop_path_kernel(scale_ref, x_ref, o_ref):
    # scale_ref: (B,) float32 in SMEM (scalar prefetch); value is 0.0 for a
    #            dropped sample or 1/keep_prob for a kept sample.
    # x_ref / o_ref: (1, t1, d2, ..., dk) tile of the current sample.
    s = scale_ref[pl.program_id(0)].astype(x_ref.dtype)   # native-dtype multiply
    o_ref[...] = x_ref[...] * s


def drop_path(x, key, drop_prob: float = 0.0, training: bool = False):
    """Pallas drop_path for (B, ...) inputs (NCHW, (B, S, D), (B, D), ...)."""
    # NOTE: drop_prob / training must be static Python values (as in PyTorch).
    if drop_prob == 0.0 or not training:
        return x
    keep_prob = 1.0 - drop_prob

    orig_shape = x.shape
    B = orig_shape[0]

    # Per-sample scale, computed once in f32 in the wrapper:
    #   scale = floor(keep_prob + U[0,1)) * (1/keep_prob)  in {0, 1/keep_prob}
    rand = jax.random.uniform(key, (B,), dtype=jnp.float32)
    scale = jnp.floor(keep_prob + rand) * jnp.float32(1.0 / keep_prob)

    # Normalize to >= 3-D without touching the minor (lane) dim, so the last
    # two block dims can always equal the full array dims (no relayout copies
    # for the common >= 3-D activations).
    if x.ndim == 1:
        xw = x.reshape(B, 1, 1)
    elif x.ndim == 2:
        xw = x.reshape(B, 1, orig_shape[1])
    else:
        xw = x

    shape = xw.shape
    d1 = shape[1]
    trailing = shape[2:]
    n_trail = len(trailing)
    itemsize = jnp.dtype(x.dtype).itemsize
    trail_elems = 1
    for d in trailing:
        trail_elems *= d
    slab_bytes = max(trail_elems * itemsize, 1)

    # ~3 MiB blocks; in+out double-buffered -> ~12 MiB VMEM, safe everywhere.
    target_block_bytes = 3 << 20
    t1 = max(1, min(d1, target_block_bytes // slab_bytes))

    # v7x has 2 TensorCores sharing HBM: make sure the grid has >= 2 steps.
    if B * pl.cdiv(d1, t1) < 2 and d1 >= 2:
        t1 = pl.cdiv(d1, 2)

    # (8,128) rule: when xw is 3-D the tiled dim is the sublane dim, so a
    # partial chunk must be a multiple of 8 (a full chunk is always legal).
    if n_trail == 1 and t1 < d1 and t1 % 8 != 0:
        t1 = (t1 // 8) * 8
        if t1 == 0:
            t1 = min(8, d1)
    t1 = min(t1, d1)

    n_chunks = pl.cdiv(d1, t1)
    block_bytes = t1 * slab_bytes
    zeros = (0,) * n_trail

    if n_chunks == 1:
        # Chunk axis degenerates: 1-D grid over batch (one fewer loop level).
        grid = (B,)
        block_shape = (1, d1) + trailing
        index_map = lambda b, s_ref: (b, 0) + zeros
        dim_sem = ("parallel",)
    else:
        grid = (B, n_chunks)
        block_shape = (1, t1) + trailing
        index_map = lambda b, c, s_ref: (b, c) + zeros
        dim_sem = ("parallel", "parallel")

    total = B * d1 * trail_elems
    cost = pl.CostEstimate(
        flops=total,
        transcendentals=0,
        bytes_accessed=2 * total * itemsize,
    )

    # Clamp the VMEM request: v7x has only 64 MiB per TensorCore, so never ask
    # for more than 48 MiB (leaves ~25% headroom there).
    # TODO(synk): if a single (1, chunk, d2..dk) slab ever exceeds ~10 MiB
    # (huge trailing dims), also tile a trailing dim instead of relying on the
    # clamp alone.
    vmem_limit = int(min(max(32 << 20, 4 * block_bytes + (4 << 20)), 48 << 20))

    out = pl.pallas_call(
        _drop_path_kernel,
        out_shape=jax.ShapeDtypeStruct(shape, x.dtype),
        grid_spec=pltpu.PrefetchScalarGridSpec(
            num_scalar_prefetch=1,
            grid=grid,
            in_specs=[pl.BlockSpec(block_shape, index_map)],
            out_specs=pl.BlockSpec(block_shape, index_map),
        ),
        compiler_params=pltpu.CompilerParams(
            dimension_semantics=dim_sem,
            vmem_limit_bytes=vmem_limit,
        ),
        cost_estimate=cost,
        # input_output_aliases={1: 0} would let XLA reuse x's HBM buffer when
        # x is dead after this op; left off so x stays usable by the caller.
    )(scale, xw)

    return out.reshape(orig_shape)


class DropPath:
    """Mirror of the PyTorch module: holds drop_prob and a training flag."""

    def __init__(self, drop_prob=None):
        self.drop_prob = drop_prob if drop_prob is not None else 0.0
        self.training = True

    def __call__(self, x, key):
        return drop_path(x, key, self.drop_prob, self.training)


if __name__ == "__main__":
    key = jax.random.PRNGKey(0)
    k_x, k_drop, k_x2, k_x3 = jax.random.split(key, 4)

    module = DropPath(drop_prob=0.25)
    module.training = True
    keep_prob = 1.0 - module.drop_prob

    # --- NCHW input consistent with the module's usage ---
    B, C, H, W = 2, 4, 16, 16
    x = jax.random.normal(k_x, (B, C, H, W), dtype=jnp.float32)
    out = jax.block_until_ready(module(x, k_drop))

    rand = jax.random.uniform(k_drop, (B,), dtype=jnp.float32)
    mask = jnp.floor(keep_prob + rand).reshape(B, 1, 1, 1)
    ref = (x / keep_prob) * mask
    assert out.shape == x.shape and out.dtype == x.dtype
    assert jnp.allclose(out, ref, atol=1e-6, rtol=1e-5)

    # --- odd shape (dims not multiples of 8/128): no pad/slice path anymore ---
    B2, C2, H2, W2 = 2, 3, 7, 9
    x_odd = jax.random.normal(k_x2, (B2, C2, H2, W2), dtype=jnp.float32)
    out_odd = jax.block_until_ready(module(x_odd, k_drop))
    rand2 = jax.random.uniform(k_drop, (B2,), dtype=jnp.float32)
    mask2 = jnp.floor(keep_prob + rand2).reshape(B2, 1, 1, 1)
    ref_odd = (x_odd / keep_prob) * mask2
    assert out_odd.shape == x_odd.shape
    assert jnp.allclose(out_odd, ref_odd, atol=1e-6, rtol=1e-5)

    # --- transformer-style (B, seq, hidden) tokens in bf16 ---
    Bt, S, D = 2, 8, 32
    x_tok = jax.random.normal(k_x3, (Bt, S, D), dtype=jnp.bfloat16)
    out_tok = jax.block_until_ready(module(x_tok, k_drop))
    rand3 = jax.random.uniform(k_drop, (Bt,), dtype=jnp.float32)
    mask3 = jnp.floor(keep_prob + rand3).reshape(Bt, 1, 1)
    ref_tok = (x_tok.astype(jnp.float32) / keep_prob) * mask3
    assert out_tok.shape == x_tok.shape and out_tok.dtype == x_tok.dtype
    assert jnp.allclose(out_tok.astype(jnp.float32), ref_tok, atol=1e-2, rtol=2e-2)

    # --- eval / drop_prob=0 path is identity ---
    module.training = False
    out_eval = jax.block_until_ready(module(x, k_drop))
    assert jnp.array_equal(out_eval, x)

    print("KERNEL_OK")
</pallas_src>

<mosaic_0001>
module attributes {stable_mosaic.version = 11 : i64} {
  func.func @_drop_path_kernel(%arg0: i32, %arg1: memref<2xf32, #tpu.memory_space<smem>>, %arg2: memref<1x4x16x16xf32, #tpu.memory_space<vmem>>, %arg3: memref<1x4x16x16xf32, #tpu.memory_space<vmem>>) attributes {dimension_semantics = [#tpu.dimension_semantics<parallel>], iteration_bounds = array<i64: 2>, scalar_prefetch = 1 : i64, scratch_operands = 0 : i64, tpu.core_type = #tpu.core_type<tc>, window_params = [{transform_indices = @transform_0, window_bounds = array<i64: 1, 4, 16, 16>}, {transform_indices = @transform_1, window_bounds = array<i64: 1, 4, 16, 16>}]} {
    %0 = arith.index_cast %arg0 : i32 to index
    %1 = memref.load %arg1[%0] : memref<2xf32, #tpu.memory_space<smem>>
    %c0 = arith.constant 0 : index
    %c0_0 = arith.constant 0 : index
    %c0_1 = arith.constant 0 : index
    %c0_2 = arith.constant 0 : index
    %2 = vector.load %arg2[%c0, %c0_0, %c0_1, %c0_2] : memref<1x4x16x16xf32, #tpu.memory_space<vmem>>, vector<1x4x16x16xf32>
    %3 = vector.broadcast %1 : f32 to vector<1x4x16x16xf32>
    %4 = arith.mulf %2, %3 : vector<1x4x16x16xf32>
    %c0_3 = arith.constant 0 : index
    %c0_4 = arith.constant 0 : index
    %c0_5 = arith.constant 0 : index
    %c0_6 = arith.constant 0 : index
    %5 = vector.load %arg3[%c0_3, %c0_4, %c0_5, %c0_6] : memref<1x4x16x16xf32, #tpu.memory_space<vmem>>, vector<1x4x16x16xf32>
    tpu.vector_store %arg3[%c0_3, %c0_4, %c0_5, %c0_6], %4 {strides = array<i32>} : memref<1x4x16x16xf32, #tpu.memory_space<vmem>>, vector<1x4x16x16xf32>,
    return
  }
  func.func @transform_0(%arg0: i32, %arg1: memref<2xf32, #tpu.memory_space<smem>>) -> (i32, i32, i32, i32) {
    %c0_i32 = arith.constant 0 : i32
    %c0_i32_0 = arith.constant 0 : i32
    %c0_i32_1 = arith.constant 0 : i32
    %c0_i32_2 = arith.constant 0 : i32
    return %arg0, %c0_i32, %c0_i32_0, %c0_i32_1 : i32, i32, i32, i32
  }
  func.func @transform_1(%arg0: i32, %arg1: memref<2xf32, #tpu.memory_space<smem>>) -> (i32, i32, i32, i32) {
    %c0_i32 = arith.constant 0 : i32
    %c0_i32_0 = arith.constant 0 : i32
    %c0_i32_1 = arith.constant 0 : i32
    %c0_i32_2 = arith.constant 0 : i32
    return %arg0, %c0_i32, %c0_i32_0, %c0_i32_1 : i32, i32, i32, i32
  }
}

</mosaic_0001>

<llo_original>
// kernel: tpu_custom_call.1
$region0: #{tpu_custom_call.1}
  #allocation0 [shape = 'u32[]', space=smem, size = 0x4, offset = 0x4, fixed_abs, tag = 'smem constant byte address 0x4 - core index']
  #allocation1 [shape = 'u32[144,128]{1,0:T(1,128)}', space=vmem, size = 0x12000, scoped, tag = 'internal scratch']
  #allocation2 [shape = 's32[1]{0}', space=sflag, size = 0x4, scoped, tag = 'scoped memory for tpu_custom_call.1']
  #allocation3 [shape = 'u8[512]{0}', space=smem, size = 0x200, scoped, tag = 'prefetched SMEM operand 0']
  %s0 = inlined_call_operand.hbm [shape: f32[2], index: 0, kind: input, shape index: {}]
  %s1 = inlined_call_operand.hbm [shape: f32[2,4,16,16], index: 1, kind: input, shape index: {}]
  %s2 = inlined_call_operand.hbm [shape: f32[2,4,16,16], index: 2, kind: output, shape index: {}]
  %s3 = sld [smem:[#allocation0]]
  $region41: #{tpu_custom_call.1} parent=0
    _
  %s5 = ssub.s32 1, %s3
  %s6 = scalar_select 0, %s5, %s3
  %8 = dma.hbm_to_smem %s0, 16, [#allocation3], [#allocation2]
  %9 = dma.done [#allocation2], 16
  %10 = sfence
  $region1: #{tpu_custom_call.1} parent=0
    #allocation4 [shape = 'u8[65536]{0}', space=vmem, size = 0x10000, scoped, tag = 'input window, operand 1']
    #allocation5 [shape = 's32[2]{0}', space=sflag, size = 0x8, scoped, tag = 'scoped memory for tpu_custom_call.1']
    #allocation6 [shape = 's32[2]{0}', space=sflag, size = 0x8, scoped, tag = 'scoped memory for tpu_custom_call.1']
    #allocation7 [shape = 'u8[65536]{0}', space=vmem, size = 0x10000, scoped, tag = 'output window, operand 0']
    %11 = vsyncpa [#allocation5], 0
    %s12 = scalar_lea.sflag [#allocation5], 1
    %13 = vsyncpa %s12, 0
    %14 = vsyncpa [#allocation6], 0
    %s15 = scalar_lea.sflag [#allocation6], 1
    %16 = vsyncpa %s15, 0
    loop: start=0, step=1, limit=4
    $region2: #{tpu_custom_call.1} parent=1 // loop_pre_header
      _
    $region3: #{tpu_custom_call.1} parent=1 // loop_header
      %s18 = sphi 0, %s22
      %p19 = scmp.ge.s32.totalorder %s18, 4
      %s28 = sphi 0, %s30
      %s31 = sphi 0, %s28
      %s32 = sphi 0, %s31
      %s48 = sphi 0, %s32
      %s54 = sphi 0, %s56
      %s57 = sphi 0, %s54
      %s58 = sphi 0, %s57
      %s74 = sphi 0, %s58
    $region4: #{tpu_custom_call.1} parent=1 // loop_header_branch
      %21 = sbr.rel (%p19) target = $region8
    $region5: #{tpu_custom_call.1} parent=1 // loop_body
      %s23 = ssub.s32 %s18, 1
      %s24 = ssub.s32 %s18, 2
      %s25 = sadd.s32 %s18, 1
      %s26 = ssub.s32 %s18, %s25
      %p27 = scmp.eq.s32.totalorder %s26, 0
      %s29 = sadd.s32 %s28, 1
      %s30 = scalar_select %p27, %s28, %s29
      %p33 = pneg %p27
      %p34 = scmp.eq.s32.totalorder %s18, 1
      %p35 = por %p33, %p34
      %p36 = scmp.ne.s32.totalorder %s28, %s31
      %p37 = scmp.eq.s32.totalorder %s18, 0
      %p38 = por %p36, %p37
      %p39 = scmp.ne.s32.totalorder %s28, %s31
      %p40 = scmp.eq.s32.totalorder %s23, 1
      %p41 = por %p39, %p40
      %p42 = scmp.ne.s32.totalorder %s31, %s32
      %p43 = scmp.eq.s32.totalorder %s23, 0
      %p44 = por %p42, %p43
      %p45 = scmp.ne.s32.totalorder %s31, %s32
      %p46 = scmp.eq.s32.totalorder %s24, 1
      %p47 = por %p45, %p46
      %p49 = scmp.ne.s32.totalorder %s32, %s48
      %p50 = scmp.eq.s32.totalorder %s24, 0
      %p51 = por %p49, %p50
      %s52 = ssub.s32 %s18, %s25
      %p53 = scmp.eq.s32.totalorder %s52, 0
      %s55 = sadd.s32 %s54, 1
      %s56 = scalar_select %p53, %s54, %s55
      %p59 = pneg %p53
      %p60 = scmp.eq.s32.totalorder %s18, 1
      %p61 = por %p59, %p60
      %p62 = scmp.ne.s32.totalorder %s54, %s57
      %p63 = scmp.eq.s32.totalorder %s18, 0
      %p64 = por %p62, %p63
      %p65 = scmp.ne.s32.totalorder %s54, %s57
      %p66 = scmp.eq.s32.totalorder %s23, 1
      %p67 = por %p65, %p66
      %p68 = scmp.ne.s32.totalorder %s57, %s58
      %p69 = scmp.eq.s32.totalorder %s23, 0
      %p70 = por %p68, %p69
      %p71 = scmp.ne.s32.totalorder %s57, %s58
      %p72 = scmp.eq.s32.totalorder %s24, 1
      %p73 = por %p71, %p72
      %p75 = scmp.ne.s32.totalorder %s58, %s74
      %p76 = scmp.eq.s32.totalorder %s24, 0
      %p77 = por %p75, %p76
      %p78 = scmp.le.s32.totalorder 1, %s18
      %p79 = scmp.lt.s32.totalorder %s18, 3
      %p80 = pnand %p78, %p79
      %p81 = pneg %p80
      // Predicated region
      $region9: #{tpu_custom_call.1} parent=5 // pred_check
        _
      $region10: #{tpu_custom_call.1} parent=5 // pred_check_branch
        %83 = sbr.rel (%p80) target = $region12
      $region11: #{tpu_custom_call.1} parent=5 // pred_region
        %s84 = ssub.s32 %s18, 1
      $region12: #{tpu_custom_call.1} parent=5 // pred_fallthru
        _
      %p85 = scmp.lt.s32.totalorder %s18, 2
      // Predicated region
      $region13: #{tpu_custom_call.1} parent=5 // pred_check
        %p86 = pneg %p85
      $region14: #{tpu_custom_call.1} parent=5 // pred_check_branch
        %88 = sbr.rel (%p86) target = $region16
      $region15: #{tpu_custom_call.1} parent=5 // pred_region
        // Predicated region
        $region17: #{tpu_custom_call.1} parent=15 // pred_check
          %p89 = pneg %p38
        $region18: #{tpu_custom_call.1} parent=15 // pred_check_branch
          %91 = sbr.rel (%p89) target = $region20
        $region19: #{tpu_custom_call.1} parent=15 // pred_region
          %s92 = sand.u32 %s28, 1
          %s93 = scalar_lea.sflag [#allocation5], %s92
          %s94 = sand.u32 %s28, 1
          %s95 = smul.addr %s94, 64
          %s96 = scalar_lea.vmem [#allocation4], %s95
          %s98 = ssub.s32 1024, 1024
          %99 = vsyncadd %s93, %s98
          %s100 = smul.addr %s18, 8
          %s101 = smul.addr %s100, 128
          %s102 = scalar_lea.hbm %s1, %s101
          %s103 = sshll.u32 %s96, 4
          %s104 = int_to_ptr.vmem [resolvable:$true] %s103
          %109 = dma.hbm_to_vmem [thread:$0]  %s102, 1024, %s104, %s93, 128, 128, 8
        $region20: #{tpu_custom_call.1} parent=15 // pred_fallthru
          _
      $region16: #{tpu_custom_call.1} parent=5 // pred_fallthru
        _
      %p110 = scmp.le.s32.totalorder 1, %s18
      %p111 = scmp.lt.s32.totalorder %s18, 3
      %p112 = pnand %p110, %p111
      %p113 = pneg %p112
      // Predicated region
      $region21: #{tpu_custom_call.1} parent=5 // pred_check
        _
      $region22: #{tpu_custom_call.1} parent=5 // pred_check_branch
        %115 = sbr.rel (%p112) target = $region24
      $region23: #{tpu_custom_call.1} parent=5 // pred_region
        %s116 = ssub.s32 %s18, 1
        %s117 = sand.u32 %s31, 1
        %s118 = scalar_lea.sflag [#allocation5], %s117
        %s119 = sand.u32 %s31, 1
        %s120 = smul.addr %s119, 64
        %s121 = scalar_lea.vmem [#allocation4], %s120
        // Predicated region
        $region25: #{tpu_custom_call.1} parent=23 // pred_check
          %p122 = pneg %p44
        $region26: #{tpu_custom_call.1} parent=23 // pred_check_branch
          %124 = sbr.rel (%p122) target = $region28
        $region27: #{tpu_custom_call.1} parent=23 // pred_region
          %125 = dma.done %s118, 1024
        $region28: #{tpu_custom_call.1} parent=23 // pred_fallthru
          _
        %s126 = sand.u32 %s31, 1
        %s127 = scalar_lea.sflag [#allocation5], %s126
        %s128 = sand.u32 %s31, 1
        %s129 = smul.addr %s128, 64
        %s130 = scalar_lea.vmem [#allocation4], %s129
        %p131 = pneg %p44
        %p132 = pneg %p41
        %p133 = pneg %p70
        %p134 = pneg %p67
        %s135 = sand.u32 %s57, 1
        %s136 = scalar_lea.sflag [#allocation6], %s135
        %s137 = sand.u32 %s57, 1
        %s138 = smul.addr %s137, 64
        %s139 = scalar_lea.vmem [#allocation7], %s138
        %s140 = sld [smem:[#allocation3 + %s23]]
        %v141 = vld [vmem:[%s121] sm:$0xff]
        %v142 = vld [vmem:[%s121 + $0x8] sm:$0xff]
        %v143 = vld [vmem:[%s121 + $0x10] sm:$0xff]
        %v144 = vld [vmem:[%s121 + $0x18] sm:$0xff]
        %v145 = vld [vmem:[%s121 + $0x20] sm:$0xff]
        %v146 = vld [vmem:[%s121 + $0x28] sm:$0xff]
        %v147 = vld [vmem:[%s121 + $0x30] sm:$0xff]
        %v148 = vld [vmem:[%s121 + $0x38] sm:$0xff]
        %v149 = vstv %s140
        %v150 = vmul.f32 %v141, %v149
        %v151 = vmul.f32 %v142, %v149
        %v152 = vmul.f32 %v143, %v149
        %v153 = vmul.f32 %v144, %v149
        %v154 = vmul.f32 %v145, %v149
        %v155 = vmul.f32 %v146, %v149
        %v156 = vmul.f32 %v147, %v149
        %v157 = vmul.f32 %v148, %v149
        %vm158 = vcmask 130048
        %159 = vst.msk [vmem:[%s139] sm:$0xff] %vm158, %v150
        %160 = vst.msk [vmem:[%s139 + $0x8] sm:$0xff] %vm158, %v151
        %161 = vst.msk [vmem:[%s139 + $0x10] sm:$0xff] %vm158, %v152
        %162 = vst.msk [vmem:[%s139 + $0x18] sm:$0xff] %vm158, %v153
        %163 = vst.msk [vmem:[%s139 + $0x20] sm:$0xff] %vm158, %v154
        %164 = vst.msk [vmem:[%s139 + $0x28] sm:$0xff] %vm158, %v155
        %165 = vst.msk [vmem:[%s139 + $0x30] sm:$0xff] %vm158, %v156
        %166 = vst.msk [vmem:[%s139 + $0x38] sm:$0xff] %vm158, %v157
        %s167 = sand.u32 %s57, 1
        %s168 = scalar_lea.sflag [#allocation6], %s167
        %s169 = sand.u32 %s57, 1
        %s170 = smul.addr %s169, 64
        %s171 = scalar_lea.vmem [#allocation7], %s170
        // Predicated region
        $region29: #{tpu_custom_call.1} parent=23 // pred_check
          %p172 = pneg %p67
        $region30: #{tpu_custom_call.1} parent=23 // pred_check_branch
          %174 = sbr.rel (%p172) target = $region32
        $region31: #{tpu_custom_call.1} parent=23 // pred_region
          %s176 = ssub.s32 1024, 1024
          %177 = vsyncadd %s168, %s176
          %s178 = smul.addr %s23, 8
          %s179 = smul.addr %s178, 128
          %s180 = scalar_lea.hbm %s2, %s179
          %s181 = sshll.u32 %s171, 4
          %s182 = int_to_ptr.vmem [resolvable:$true] %s181
          %187 = dma.vmem_to_hbm [thread:$0]  %s182, 1024, %s180, %s168, 128, 128, 8
        $region32: #{tpu_custom_call.1} parent=23 // pred_fallthru
          _
      $region24: #{tpu_custom_call.1} parent=5 // pred_fallthru
        _
      %p188 = scmp.le.s32.totalorder 2, %s18
      // Predicated region
      $region33: #{tpu_custom_call.1} parent=5 // pred_check
        %p189 = pneg %p188
      $region34: #{tpu_custom_call.1} parent=5 // pred_check_branch
        %191 = sbr.rel (%p189) target = $region36
      $region35: #{tpu_custom_call.1} parent=5 // pred_region
        %s192 = ssub.s32 %s18, 2
        // Predicated region
        $region37: #{tpu_custom_call.1} parent=35 // pred_check
          %p193 = pneg %p73
        $region38: #{tpu_custom_call.1} parent=35 // pred_check_branch
          %195 = sbr.rel (%p193) target = $region40
        $region39: #{tpu_custom_call.1} parent=35 // pred_region
          %s196 = sand.u32 %s58, 1
          %s197 = scalar_lea.sflag [#allocation6], %s196
          %s198 = sand.u32 %s58, 1
          %s199 = smul.addr %s198, 64
          %s200 = scalar_lea.vmem [#allocation7], %s199
          %201 = dma.done %s197, 1024
        $region40: #{tpu_custom_call.1} parent=35 // pred_fallthru
          _
      $region36: #{tpu_custom_call.1} parent=5 // pred_fallthru
        _
    $region6: #{tpu_custom_call.1} parent=1 // loop_footer
      %s22 = sadd.s32 1, %s18
    $region7: #{tpu_custom_call.1} parent=1 // loop_footer_branch
      %17 = sbr.rel target = $region3
    $region8: #{tpu_custom_call.1} parent=1 // loop_exit
      _
    %202 = vsyncpa [#allocation5], 1
    %s203 = scalar_lea.sflag [#allocation5], 1
    %204 = vsyncpa %s203, 1
    %205 = vsyncpa [#allocation6], 1
    %s206 = scalar_lea.sflag [#allocation6], 1
    %207 = vsyncpa %s206, 1

</llo_original>
